<compile_context>
chip_gen: v5e
topology: v5e:2x2
jax: 0.10.0
libtpu: 0.0.40
codegen_flags: <defaults>
</compile_context>

<pallas_src>
import jax
import jax.numpy as jnp
from jax.experimental import pallas as pl
from jax.experimental.pallas import tpu as pltpu

IN_FEATURES = 35
HIDDEN1 = 128
HIDDEN2 = 64


def mlp_kernel(x_ref, w1_ref, b1_ref, w23_ref, b23_ref, o_ref):
    """One batch tile: out = relu(x @ W1 + b1) @ W23 + b23, lane-dense store."""
    # layer_1 (MXU, bf16 operands / f32 accumulation) + ReLU
    x = x_ref[...].astype(w1_ref.dtype)                                # (TB, 35)
    h1 = jnp.dot(x, w1_ref[...], preferred_element_type=jnp.float32)
    h1 = jnp.maximum(h1 + b1_ref[...], 0.0)                            # (TB, 128)

    # folded layer_2 + layer_3: per-row dot against w23 (VPU mul + lane reduce)
    out = jnp.sum(h1 * w23_ref[...], axis=-1, keepdims=True)           # (TB, 1)
    # relayout batch rows into a lane-dense (TB//128, 128) block -> unmasked vst
    o_ref[...] = (out + b23_ref[0, 0]).reshape(o_ref.shape).astype(o_ref.dtype)


def _round_up(x, m):
    return ((x + m - 1) // m) * m


def _pick_tile_b(batch):
    """Batch tile (rows): multiple of 128 (for the lane-dense output reshape);
    a single exact tile when the whole batch fits, otherwise a multiple of 1024
    so the output block's sublane dim stays a multiple of 8."""
    b128 = _round_up(batch, 128)
    try:
        kind = jax.devices()[0].device_kind.lower()
    except Exception:
        kind = ""
    max_tile = 8192      # 35-wide input block lane-pads to 128 -> 4 MiB / buffer
    if "v7" in kind or "7x" in kind:
        # keep >= 2 grid steps so the "parallel" batch axis shards across 2 TCs
        max_tile = min(max_tile, max(1024, _round_up(pl.cdiv(b128, 2), 1024)))
    if b128 <= max_tile:
        return b128      # single tile: block rows == output rows
    return max_tile


def league_model_forward(x, params, *, tile_b=None, mxu_dtype=jnp.bfloat16):
    """x: (B, 35) float32.  params = (w1, b1, w2, b2, w3, b3), weights (in, out)."""
    w1, b1, w2, b2, w3, b3 = params
    B = x.shape[0]
    b128 = _round_up(B, 128)

    if tile_b is None:
        tile_b = _pick_tile_b(B)
    else:
        tile_b = _round_up(max(int(tile_b), 128), 128)
    # Layout rules for the lane-dense output block: either one tile covering the
    # whole (128-rounded) batch, or a block whose sublane dim is a multiple of 8.
    if tile_b >= b128:
        tile_b = b128
    elif (tile_b // 128) % 8 != 0:
        tile_b = min(_round_up(tile_b, 1024), b128)

    n_tiles = pl.cdiv(B, tile_b)
    out_rows = b128 // 128
    block_rows = tile_b // 128

    # Fold the two activation-free tail layers (once, outside the kernel):
    #   (h @ W2 + b2) @ W3 + b3  ==  h @ (W2 @ W3) + (b2 @ W3 + b3)
    hi = jax.lax.Precision.HIGHEST
    w23 = jnp.dot(w2, w3, precision=hi).reshape(1, HIDDEN1)        # (1, 128) f32
    b23 = (jnp.dot(b2, w3, precision=hi) + b3).reshape(1, 1)       # (1, 1) scalar

    out2d = pl.pallas_call(
        mlp_kernel,
        out_shape=jax.ShapeDtypeStruct((out_rows, 128), jnp.float32),
        grid=(n_tiles,),
        in_specs=[
            # streamed input: one (possibly partial) batch tile per grid step
            pl.BlockSpec((tile_b, IN_FEATURES), lambda i: (i, 0)),
            # weights / biases: constant block index -> resident across steps
            pl.BlockSpec((IN_FEATURES, HIDDEN1), lambda i: (0, 0)),
            pl.BlockSpec((1, HIDDEN1), lambda i: (0, 0)),
            pl.BlockSpec((1, HIDDEN1), lambda i: (0, 0)),
            # folded bias scalar lives in SMEM (avoids a padded VMEM tile)
            pl.BlockSpec(memory_space=pltpu.MemorySpace.SMEM),
        ],
        # lane-dense output: batch row r -> element (r // 128, r % 128)
        out_specs=pl.BlockSpec((block_rows, 128), lambda i: (i, 0)),
        compiler_params=pltpu.CompilerParams(
            dimension_semantics=("parallel",),    # batch tiles are independent
            vmem_limit_bytes=48 * 1024 * 1024,
        ),
    )(x, w1.astype(mxu_dtype), b1, w23, b23)

    # flatten lane-dense layout back to (B, 1); OOB/garbage tail rows drop here
    return out2d.reshape(-1)[:B].reshape(B, 1)


def init_params(key):
    """Deterministic init mirroring PyTorch's default Linear init
    (uniform in +-1/sqrt(fan_in)). Weights stored as (in, out)."""
    def linear(k, fan_in, fan_out):
        kw, kb = jax.random.split(k)
        bound = 1.0 / jnp.sqrt(jnp.float32(fan_in))
        w = jax.random.uniform(kw, (fan_in, fan_out), jnp.float32, -bound, bound)
        b = jax.random.uniform(kb, (1, fan_out), jnp.float32, -bound, bound)
        return w, b

    k1, k2, k3 = jax.random.split(key, 3)
    w1, b1 = linear(k1, IN_FEATURES, HIDDEN1)
    w2, b2 = linear(k2, HIDDEN1, HIDDEN2)
    w3, b3 = linear(k3, HIDDEN2, 1)
    return (w1, b1, w2, b2, w3, b3)


def reference_forward(x, params):
    """Faithful 3-matmul f32 reference matching the PyTorch forward()."""
    w1, b1, w2, b2, w3, b3 = params
    h1 = jnp.maximum(x @ w1 + b1, 0.0)
    h2 = h1 @ w2 + b2
    return h2 @ w3 + b3


if __name__ == "__main__":
    key = jax.random.PRNGKey(0)
    k_params, k_x = jax.random.split(key)
    params = init_params(k_params)

    def check(batch, **kw):
        xb = jax.random.normal(jax.random.fold_in(k_x, batch),
                               (batch, IN_FEATURES), dtype=jnp.float32)
        got = jax.block_until_ready(league_model_forward(xb, params, **kw))
        ref = reference_forward(xb, params)
        assert got.shape == (batch, 1), got.shape
        err = float(jnp.max(jnp.abs(got - ref)))
        # layer-1 uses bf16 MXU operands (f32 accumulation), plus the exact
        # layer-2/3 fold -> expect ~1e-3-level differences vs the f32 reference.
        assert jnp.allclose(got, ref, atol=2e-2, rtol=2e-2), (
            f"mismatch vs reference at batch={batch}: max abs err {err:.3e}")

    check(16)                   # small batch: single partial tile, lane-dense out
    check(300)                  # single tile, partial trailing rows
    check(2500, tile_b=1024)    # multi-tile grid + masked final output block
    print("KERNEL_OK")
</pallas_src>

<mosaic_0001>
module attributes {stable_mosaic.version = 11 : i64} {
  func.func @mlp_kernel(%arg0: i32, %arg1: memref<128x35xf32, #tpu.memory_space<vmem>>, %arg2: memref<35x128xbf16, #tpu.memory_space<vmem>>, %arg3: memref<1x128xf32, #tpu.memory_space<vmem>>, %arg4: memref<1x128xf32, #tpu.memory_space<vmem>>, %arg5: memref<1x1xf32, #tpu.memory_space<smem>>, %arg6: memref<1x128xf32, #tpu.memory_space<vmem>>) attributes {dimension_semantics = [#tpu.dimension_semantics<parallel>], iteration_bounds = array<i64: 1>, scalar_prefetch = 0 : i64, scratch_operands = 0 : i64, tpu.core_type = #tpu.core_type<tc>, window_params = [{transform_indices = @transform_0, window_bounds = array<i64: 128, 35>}, {pipeline_mode = #tpu.pipeline_mode<synchronous>, transform_indices = @transform_1, window_bounds = array<i64: 35, 128>}, {pipeline_mode = #tpu.pipeline_mode<synchronous>, transform_indices = @transform_2, window_bounds = array<i64: 1, 128>}, {pipeline_mode = #tpu.pipeline_mode<synchronous>, transform_indices = @transform_3, window_bounds = array<i64: 1, 128>}, {transform_indices = @transform_4, window_bounds = array<i64: 1, 1>}, {transform_indices = @transform_5, window_bounds = array<i64: 1, 128>}]} {
    %c0 = arith.constant 0 : index
    %c0_0 = arith.constant 0 : index
    %0 = vector.load %arg1[%c0, %c0_0] : memref<128x35xf32, #tpu.memory_space<vmem>>, vector<128x35xf32>
    %1 = arith.truncf %0 : vector<128x35xf32> to vector<128x35xbf16>
    %c0_1 = arith.constant 0 : index
    %c0_2 = arith.constant 0 : index
    %2 = vector.load %arg2[%c0_1, %c0_2] : memref<35x128xbf16, #tpu.memory_space<vmem>>, vector<35x128xbf16>
    %cst = arith.constant dense<0.000000e+00> : vector<128x128xf32>
    %3 = tpu.matmul %1, %2, %cst {dimension_numbers = #tpu.dot_dimension_numbers<[1], [0], [0], [1], [0, 0, 1, 1], [], []>} : vector<128x35xbf16>, vector<35x128xbf16>, vector<128x128xf32> -> vector<128x128xf32>
    %c0_3 = arith.constant 0 : index
    %c0_4 = arith.constant 0 : index
    %4 = vector.load %arg3[%c0_3, %c0_4] : memref<1x128xf32, #tpu.memory_space<vmem>>, vector<1x128xf32>
    %5 = vector.broadcast %4 : vector<1x128xf32> to vector<128x128xf32>
    %6 = arith.addf %3, %5 : vector<128x128xf32>
    %cst_5 = arith.constant 0.000000e+00 : f32
    %7 = vector.broadcast %cst_5 : f32 to vector<128x128xf32>
    %8 = arith.maximumf %6, %7 : vector<128x128xf32>
    %c0_6 = arith.constant 0 : index
    %c0_7 = arith.constant 0 : index
    %9 = vector.load %arg4[%c0_6, %c0_7] : memref<1x128xf32, #tpu.memory_space<vmem>>, vector<1x128xf32>
    %10 = vector.broadcast %9 : vector<1x128xf32> to vector<128x128xf32>
    %11 = arith.mulf %8, %10 : vector<128x128xf32>
    %cst_8 = arith.constant dense<0.000000e+00> : vector<128xf32>
    %12 = vector.multi_reduction <add>, %11, %cst_8 [1] : vector<128x128xf32> to vector<128xf32>
    %13 = vector.shape_cast %12 : vector<128xf32> to vector<128x1xf32>
    %c0_9 = arith.constant 0 : index
    %c0_10 = arith.constant 0 : index
    %14 = memref.load %arg5[%c0_9, %c0_10] : memref<1x1xf32, #tpu.memory_space<smem>>
    %15 = vector.broadcast %14 : f32 to vector<128x1xf32>
    %16 = arith.addf %13, %15 : vector<128x1xf32>
    %17 = vector.shape_cast %16 : vector<128x1xf32> to vector<1x128xf32>
    %c0_11 = arith.constant 0 : index
    %c0_12 = arith.constant 0 : index
    %18 = vector.load %arg6[%c0_11, %c0_12] : memref<1x128xf32, #tpu.memory_space<vmem>>, vector<1x128xf32>
    tpu.vector_store %arg6[%c0_11, %c0_12], %17 {strides = array<i32>} : memref<1x128xf32, #tpu.memory_space<vmem>>, vector<1x128xf32>,
    return
  }
  func.func @transform_0(%arg0: i32) -> (i32, i32) {
    %c0_i32 = arith.constant 0 : i32
    %c0_i32_0 = arith.constant 0 : i32
    return %arg0, %c0_i32 : i32, i32
  }
  func.func @transform_1(%arg0: i32) -> (i32, i32) {
    %c0_i32 = arith.constant 0 : i32
    %c0_i32_0 = arith.constant 0 : i32
    %c0_i32_1 = arith.constant 0 : i32
    return %c0_i32, %c0_i32_0 : i32, i32
  }
  func.func @transform_2(%arg0: i32) -> (i32, i32) {
    %c0_i32 = arith.constant 0 : i32
    %c0_i32_0 = arith.constant 0 : i32
    %c0_i32_1 = arith.constant 0 : i32
    return %c0_i32, %c0_i32_0 : i32, i32
  }
  func.func @transform_3(%arg0: i32) -> (i32, i32) {
    %c0_i32 = arith.constant 0 : i32
    %c0_i32_0 = arith.constant 0 : i32
    %c0_i32_1 = arith.constant 0 : i32
    return %c0_i32, %c0_i32_0 : i32, i32
  }
  func.func @transform_4(%arg0: i32) -> (i32, i32) {
    %c0_i32 = arith.constant 0 : i32
    %c0_i32_0 = arith.constant 0 : i32
    %c0_i32_1 = arith.constant 0 : i32
    return %c0_i32, %c0_i32_0 : i32, i32
  }
  func.func @transform_5(%arg0: i32) -> (i32, i32) {
    %c0_i32 = arith.constant 0 : i32
    %c0_i32_0 = arith.constant 0 : i32
    return %arg0, %c0_i32 : i32, i32
  }
}

</mosaic_0001>

<llo_original>
// kernel: tpu_custom_call.1
$region0: #{tpu_custom_call.1}
  #allocation0 [shape = 'u32[]', space=smem, size = 0x4, offset = 0x4, fixed_abs, tag = 'smem constant byte address 0x4 - core index']
  #allocation1 [shape = 'u32[72,128]{1,0:T(1,128)}', space=vmem, size = 0x9000, scoped, tag = 'internal scratch']
  #allocation2 [shape = 'f32[1,1]{1,0:T(1,128)S(6)}', space=smem, size = 0x200, scoped, tag = 'scoped memory for tpu_custom_call.1']
  %s0 = inlined_call_operand.hbm [shape: f32[16,35], index: 0, kind: input, shape index: {}]
  %s1 = inlined_call_operand.hbm [shape: bf16[35,128], index: 1, kind: input, shape index: {}]
  %s2 = inlined_call_operand.vmem [shape: f32[1,128], index: 2, kind: input, shape index: {}]
  %s3 = inlined_call_operand.vmem [shape: f32[1,128], index: 3, kind: input, shape index: {}]
  %s4 = inlined_call_operand.<no memory space> [shape: f32[1,1], index: 4, kind: input, shape index: {}]
  %s5 = inlined_call_operand.hbm [shape: f32[1,128], index: 5, kind: output, shape index: {}]
  %s6 = sld [smem:[#allocation0]]
  $region38: #{tpu_custom_call.1} parent=0
    _
  %s8 = ssub.s32 1, %s6
  %s9 = scalar_select 0, %s8, %s6
  %10 = sst [smem:[#allocation2]] %s4
  $region1: #{tpu_custom_call.1} parent=0
    #allocation3 [shape = 'u8[65536]{0}', space=vmem, size = 0x10000, scoped, tag = 'input window, operand 0, single buffered']
    #allocation4 [shape = 's32[1]{0}', space=sflag, size = 0x4, scoped, tag = 'scoped memory for tpu_custom_call.1']
    #allocation5 [shape = 's32[1]{0}', space=sflag, size = 0x4, scoped, tag = 'scoped memory for tpu_custom_call.1']
    #allocation6 [shape = 'u8[10240]{0}', space=vmem, size = 0x2800, scoped, tag = 'input window, operand 1, single buffered']
    #allocation7 [shape = 's32[1]{0}', space=sflag, size = 0x4, scoped, tag = 'scoped memory for tpu_custom_call.1']
    #allocation8 [shape = 'u8[512]{0}', space=vmem, size = 0x400, scoped, tag = 'output window, operand 0, single buffered']
    %11 = vsyncpa [#allocation4], 0
    %12 = vsyncpa [#allocation7], 0
    %13 = vsyncpa [#allocation5], 0
    // Predicated region
    $region2: #{tpu_custom_call.1} parent=1 // pred_check
      _
    $region3: #{tpu_custom_call.1} parent=1 // pred_check_branch
      %15 = sbr.rel (0) target = $region5
    $region4: #{tpu_custom_call.1} parent=1 // pred_region
      %17 = vsyncadd [#allocation4], 1792
      %s18 = sshll.u32 %s0, 4
      %s19 = int_to_ptr.hbm [resolvable:$true] %s18
      %s20 = sshll.u32 [#allocation3], 4
      %s21 = int_to_ptr.vmem [resolvable:$true] %s20
      %26 = dma.hbm_to_vmem [thread:$0]  %s19, 256, %s21, [#allocation4], 128, 128, 8
    $region5: #{tpu_custom_call.1} parent=1 // pred_fallthru
      _
    // Predicated region
    $region6: #{tpu_custom_call.1} parent=1 // pred_check
      _
    $region7: #{tpu_custom_call.1} parent=1 // pred_check_branch
      %28 = sbr.rel (0) target = $region9
    $region8: #{tpu_custom_call.1} parent=1 // pred_region
      %30 = vsyncadd [#allocation7], 0
      %s31 = sshll.u32 %s1, 4
      %s32 = int_to_ptr.hbm [resolvable:$true] %s31
      %s33 = sshll.u32 [#allocation6], 4
      %s34 = int_to_ptr.vmem [resolvable:$true] %s33
      %39 = dma.hbm_to_vmem [thread:$0]  %s32, 320, %s34, [#allocation7], 64, 64, 4
    $region9: #{tpu_custom_call.1} parent=1 // pred_fallthru
      _
    // Predicated region
    $region10: #{tpu_custom_call.1} parent=1 // pred_check
      _
    $region11: #{tpu_custom_call.1} parent=1 // pred_check_branch
      %41 = sbr.rel (0) target = $region13
    $region12: #{tpu_custom_call.1} parent=1 // pred_region
      _
    $region13: #{tpu_custom_call.1} parent=1 // pred_fallthru
      _
    // Predicated region
    $region14: #{tpu_custom_call.1} parent=1 // pred_check
      _
    $region15: #{tpu_custom_call.1} parent=1 // pred_check_branch
      %43 = sbr.rel (0) target = $region17
    $region16: #{tpu_custom_call.1} parent=1 // pred_region
      _
    $region17: #{tpu_custom_call.1} parent=1 // pred_fallthru
      _
    // Predicated region
    $region18: #{tpu_custom_call.1} parent=1 // pred_check
      _
    $region19: #{tpu_custom_call.1} parent=1 // pred_check_branch
      %45 = sbr.rel (0) target = $region21
    $region20: #{tpu_custom_call.1} parent=1 // pred_region
      _
    $region21: #{tpu_custom_call.1} parent=1 // pred_fallthru
      _
    // Predicated region
    $region22: #{tpu_custom_call.1} parent=1 // pred_check
      _
    $region23: #{tpu_custom_call.1} parent=1 // pred_check_branch
      %47 = sbr.rel (0) target = $region25
    $region24: #{tpu_custom_call.1} parent=1 // pred_region
      %49 = dma.done [#allocation4], 2048
    $region25: #{tpu_custom_call.1} parent=1 // pred_fallthru
      _
    // Predicated region
    $region26: #{tpu_custom_call.1} parent=1 // pred_check
      _
    $region27: #{tpu_custom_call.1} parent=1 // pred_check_branch
      %51 = sbr.rel (0) target = $region29
    $region28: #{tpu_custom_call.1} parent=1 // pred_region
      %53 = dma.done [#allocation7], 320
    $region29: #{tpu_custom_call.1} parent=1 // pred_fallthru
      _
    %v55 = vld [vmem:[#allocation3] sm:$0xff]
    %v56 = vld [vmem:[#allocation3 + $0x8] sm:$0xff]
    %v57 = vld [vmem:[#allocation3 + $0x10] sm:$0xff]
    %v58 = vld [vmem:[#allocation3 + $0x18] sm:$0xff]
    %v59 = vld [vmem:[#allocation3 + $0x20] sm:$0xff]
    %v60 = vld [vmem:[#allocation3 + $0x28] sm:$0xff]
    %v61 = vld [vmem:[#allocation3 + $0x30] sm:$0xff]
    %v62 = vld [vmem:[#allocation3 + $0x38] sm:$0xff]
    %v63 = vld [vmem:[#allocation3 + $0x40] sm:$0xff]
    %v64 = vld [vmem:[#allocation3 + $0x48] sm:$0xff]
    %v65 = vld [vmem:[#allocation3 + $0x50] sm:$0xff]
    %v66 = vld [vmem:[#allocation3 + $0x58] sm:$0xff]
    %v67 = vld [vmem:[#allocation3 + $0x60] sm:$0xff]
    %v68 = vld [vmem:[#allocation3 + $0x68] sm:$0xff]
    %v69 = vld [vmem:[#allocation3 + $0x70] sm:$0xff]
    %v70 = vld [vmem:[#allocation3 + $0x78] sm:$0xff]
    %v71 = vpack.c.bf16 %v56, %v55
    %v72 = vpack.c.bf16 %v58, %v57
    %v73 = vpack.c.bf16 %v60, %v59
    %v74 = vpack.c.bf16 %v62, %v61
    %v75 = vpack.c.bf16 %v64, %v63
    %v76 = vpack.c.bf16 %v66, %v65
    %v77 = vpack.c.bf16 %v68, %v67
    %v78 = vpack.c.bf16 %v70, %v69
    %v79 = vld [vmem:[#allocation6] sm:$0xf]
    %v80 = vld [vmem:[#allocation6 + $0x4] sm:$0xf]
    %v81 = vld [vmem:[#allocation6 + $0x8] sm:$0xf]
    %v82 = vld [vmem:[#allocation6 + $0xc] sm:$0xf]
    %v83 = vld [vmem:[#allocation6 + $0x10] sm:$0x3]
    %v84 = vld [vmem:[%s2] sm:$0x1]
    %v86 = vperm.slane %v84, 0
    %v93 = vunpack.c.l.b16 %v79
    %v94 = vunpack.c.l.b16 %v80
    %v95 = vunpack.c.l.b16 %v81
    %v96 = vunpack.c.l.b16 %v82
    %v97 = vunpack.c.l.b16 %v83
    %v98 = vpack.c.b16 %v94, %v93
    %v99 = vpack.c.b16 %v96, %v95
    %v100 = vpack.c.b16 %v97, %v97
    %vm103 = vcmask 285696
    %v105 = vsel %vm103, %v71, 0
    %v108 = vsel %vm103, %v72, 0
    %v111 = vsel %vm103, %v73, 0
    %v114 = vsel %vm103, %v74, 0
    %v117 = vsel %vm103, %v75, 0
    %v120 = vsel %vm103, %v76, 0
    %v123 = vsel %vm103, %v77, 0
    %v126 = vsel %vm103, %v78, 0
    %vm128 = vcmask 1040384
    %vm129 = vcmask 1041408
    %v130 = vsel %vm128, 4294967295, 65535
    %v131 = vsel %vm129, %v130, 0
    %v133 = vand.u32 %v100, %v131
    %135 = vmatpush.bf16.msra.mxu0 0
    %136 = vmatpush.bf16.msra.mxu0 0
    %137 = vmatpush.bf16.msra.mxu0 0
    %138 = vmatpush.bf16.msra.mxu0 0
    %139 = vmatpush.bf16.msra.mxu0 0
    %140 = vmatpush.bf16.msra.mxu0 %v133
    %141 = vmatpush.bf16.msra.mxu0 %v99
    %142 = vmatpush.bf16.msra.mxu0 %v98
    %143 = vmatmul.bf16.gmra.mxu0 %v105
    %v144 = vpop.f32.mrf.mxu0
    %v145 = vadd.f32 %v86, %v144
    %v146 = vpop.f32.mrf.mxu0
    %v147 = vadd.f32 %v86, %v146
    %148 = vmatmul.bf16.gmra.mxu0 %v108
    %v149 = vpop.f32.mrf.mxu0
    %v150 = vadd.f32 %v86, %v149
    %v151 = vpop.f32.mrf.mxu0
    %v152 = vadd.f32 %v86, %v151
    %153 = vmatmul.bf16.gmra.mxu0 %v111
    %v154 = vpop.f32.mrf.mxu0
    %v155 = vadd.f32 %v86, %v154
    %v156 = vpop.f32.mrf.mxu0
    %v157 = vadd.f32 %v86, %v156
    %158 = vmatmul.bf16.gmra.mxu0 %v114
    %v159 = vpop.f32.mrf.mxu0
    %v160 = vadd.f32 %v86, %v159
    %v161 = vpop.f32.mrf.mxu0
    %v162 = vadd.f32 %v86, %v161
    %163 = vmatmul.bf16.gmra.mxu0 %v117
    %v164 = vpop.f32.mrf.mxu0
    %v165 = vadd.f32 %v86, %v164
    %v166 = vpop.f32.mrf.mxu0
    %v167 = vadd.f32 %v86, %v166
    %168 = vmatmul.bf16.gmra.mxu0 %v120
    %v169 = vpop.f32.mrf.mxu0
    %v170 = vadd.f32 %v86, %v169
    %v171 = vpop.f32.mrf.mxu0
    %v172 = vadd.f32 %v86, %v171
    %173 = vmatmul.bf16.gmra.mxu0 %v123
    %v174 = vpop.f32.mrf.mxu0
    %v175 = vadd.f32 %v86, %v174
    %v176 = vpop.f32.mrf.mxu0
    %v177 = vadd.f32 %v86, %v176
    %178 = vmatmul.bf16.gmra.mxu0 %v126
    %v179 = vpop.f32.mrf.mxu0
    %v180 = vadd.f32 %v86, %v179
    %v181 = vpop.f32.mrf.mxu0
    %v182 = vadd.f32 %v86, %v181
    %183 = vdwg.mxu0
    %v184 = vmax.f32 %v145, 0.0
    %v185 = vmax.f32 %v147, 0.0
    %v186 = vmax.f32 %v150, 0.0
    %v187 = vmax.f32 %v152, 0.0
    %v188 = vmax.f32 %v155, 0.0
    %v189 = vmax.f32 %v157, 0.0
    %v190 = vmax.f32 %v160, 0.0
    %v191 = vmax.f32 %v162, 0.0
    %v192 = vmax.f32 %v165, 0.0
    %v193 = vmax.f32 %v167, 0.0
    %v194 = vmax.f32 %v170, 0.0
    %v195 = vmax.f32 %v172, 0.0
    %v196 = vmax.f32 %v175, 0.0
    %v197 = vmax.f32 %v177, 0.0
    %v198 = vmax.f32 %v180, 0.0
    %v199 = vmax.f32 %v182, 0.0
    %v200 = vld [vmem:[%s3] sm:$0x1]
    %v202 = vperm.slane %v200, 0
    %v204 = vmul.f32 %v184, %v202
    %v205 = vmul.f32 %v185, %v202
    %v206 = vmul.f32 %v186, %v202
    %v207 = vmul.f32 %v187, %v202
    %v208 = vmul.f32 %v188, %v202
    %v209 = vmul.f32 %v189, %v202
    %v210 = vmul.f32 %v190, %v202
    %v211 = vmul.f32 %v191, %v202
    %v212 = vmul.f32 %v192, %v202
    %v213 = vmul.f32 %v193, %v202
    %v214 = vmul.f32 %v194, %v202
    %v215 = vmul.f32 %v195, %v202
    %v216 = vmul.f32 %v196, %v202
    %v217 = vmul.f32 %v197, %v202
    %v218 = vmul.f32 %v198, %v202
    %v219 = vmul.f32 %v199, %v202
    %220 = vadd.xlane.f32.xlu0 %v204
    %v221 = vpop.xlane.xlu0 %220
    %222 = vadd.xlane.f32.xlu0 %v205
    %v223 = vpop.xlane.xlu0 %222
    %224 = vadd.xlane.f32.xlu0 %v206
    %v225 = vpop.xlane.xlu0 %224
    %226 = vadd.xlane.f32.xlu0 %v207
    %v227 = vpop.xlane.xlu0 %226
    %228 = vadd.xlane.f32.xlu0 %v208
    %v229 = vpop.xlane.xlu0 %228
    %230 = vadd.xlane.f32.xlu0 %v209
    %v231 = vpop.xlane.xlu0 %230
    %232 = vadd.xlane.f32.xlu0 %v210
    %v233 = vpop.xlane.xlu0 %232
    %234 = vadd.xlane.f32.xlu0 %v211
    %v235 = vpop.xlane.xlu0 %234
    %236 = vadd.xlane.f32.xlu0 %v212
    %v237 = vpop.xlane.xlu0 %236
    %238 = vadd.xlane.f32.xlu0 %v213
    %v239 = vpop.xlane.xlu0 %238
    %240 = vadd.xlane.f32.xlu0 %v214
    %v241 = vpop.xlane.xlu0 %240
    %242 = vadd.xlane.f32.xlu0 %v215
    %v243 = vpop.xlane.xlu0 %242
    %244 = vadd.xlane.f32.xlu0 %v216
    %v245 = vpop.xlane.xlu0 %244
    %246 = vadd.xlane.f32.xlu0 %v217
    %v247 = vpop.xlane.xlu0 %246
    %248 = vadd.xlane.f32.xlu0 %v218
    %v249 = vpop.xlane.xlu0 %248
    %250 = vadd.xlane.f32.xlu0 %v219
    %v251 = vpop.xlane.xlu0 %250
    %s252 = sld [smem:[#allocation2]]
    %v253 = vstv %s252
    %v254 = vadd.f32 %v221, %v253
    %v255 = vadd.f32 %v223, %v253
    %v256 = vadd.f32 %v225, %v253
    %v257 = vadd.f32 %v227, %v253
    %v258 = vadd.f32 %v229, %v253
    %v259 = vadd.f32 %v231, %v253
    %v260 = vadd.f32 %v233, %v253
    %v261 = vadd.f32 %v235, %v253
    %v262 = vadd.f32 %v237, %v253
    %v263 = vadd.f32 %v239, %v253
    %v264 = vadd.f32 %v241, %v253
    %v265 = vadd.f32 %v243, %v253
    %v266 = vadd.f32 %v245, %v253
    %v267 = vadd.f32 %v247, %v253
    %v268 = vadd.f32 %v249, %v253
    %v269 = vadd.f32 %v251, %v253
    %v286 = vlaneseq
    %v287 = vand.u32 %v286, 127
    %v288 = vperm.slane %v254, %v287
    %v289 = vadd.s32 %v287, 4294967288
    %v290 = vperm.slane %v255, %v289
    %vm291 = vcmask 130112
    %v292 = vsel %vm291, %v290, %v288
    %v293 = vadd.s32 %v287, 4294967280
    %v294 = vperm.slane %v256, %v293
    %vm295 = vcmask 195712
    %v296 = vsel %vm295, %v294, %v292
    %v297 = vadd.s32 %v287, 4294967272
    %v298 = vperm.slane %v257, %v297
    %vm299 = vcmask 261312
    %v300 = vsel %vm299, %v298, %v296
    %v301 = vadd.s32 %v287, 4294967264
    %v302 = vperm.slane %v258, %v301
    %vm303 = vcmask 326912
    %v304 = vsel %vm303, %v302, %v300
    %v305 = vadd.s32 %v287, 4294967256
    %v306 = vperm.slane %v259, %v305
    %vm307 = vcmask 392512
    %v308 = vsel %vm307, %v306, %v304
    %v309 = vadd.s32 %v287, 4294967248
    %v310 = vperm.slane %v260, %v309
    %vm311 = vcmask 458112
    %v312 = vsel %vm311, %v310, %v308
    %v313 = vadd.s32 %v287, 4294967240
    %v314 = vperm.slane %v261, %v313
    %vm315 = vcmask 523712
    %v316 = vsel %vm315, %v314, %v312
    %v317 = vadd.s32 %v287, 4294967232
    %v318 = vperm.slane %v262, %v317
    %vm319 = vcmask 589312
    %v320 = vsel %vm319, %v318, %v316
    %v321 = vadd.s32 %v287, 4294967224
    %v322 = vperm.slane %v263, %v321
    %vm323 = vcmask 654912
    %v324 = vsel %vm323, %v322, %v320
    %v325 = vadd.s32 %v287, 4294967216
    %v326 = vperm.slane %v264, %v325
    %vm327 = vcmask 720512
    %v328 = vsel %vm327, %v326, %v324
    %v329 = vadd.s32 %v287, 4294967208
    %v330 = vperm.slane %v265, %v329
    %vm331 = vcmask 786112
    %v332 = vsel %vm331, %v330, %v328
    %v333 = vadd.s32 %v287, 4294967200
    %v334 = vperm.slane %v266, %v333
    %vm335 = vcmask 851712
    %v336 = vsel %vm335, %v334, %v332
    %v337 = vadd.s32 %v287, 4294967192
    %v338 = vperm.slane %v267, %v337
    %vm339 = vcmask 917312
    %v340 = vsel %vm339, %v338, %v336
    %v341 = vadd.s32 %v287, 4294967184
    %v342 = vperm.slane %v268, %v341
    %vm343 = vcmask 982912
    %v344 = vsel %vm343, %v342, %v340
    %v345 = vadd.s32 %v287, 4294967176
    %v346 = vperm.slane %v269, %v345
    %vm347 = vcmask 1048512
    %v348 = vsel %vm347, %v346, %v344
    %350 = vst [vmem:[#allocation8] sm:$0x1] %v348
    // Predicated region
    $region30: #{tpu_custom_call.1} parent=1 // pred_check
      _
    $region31: #{tpu_custom_call.1} parent=1 // pred_check_branch
      %352 = sbr.rel (0) target = $region33
    $region32: #{tpu_custom_call.1} parent=1 // pred_region
      %354 = vsyncadd [#allocation5], 0
      %s356 = sshll.u32 [#allocation8], 4
      %s357 = int_to_ptr.vmem [resolvable:$true] %s356
      %s358 = sshll.u32 %s5, 4
      %s359 = int_to_ptr.hbm [resolvable:$true] %s358
      %361 = dma.vmem_to_hbm [thread:$0]  %s357, 16, %s359, [#allocation5]
    $region33: #{tpu_custom_call.1} parent=1 // pred_fallthru
      _
    // Predicated region
    $region34: #{tpu_custom_call.1} parent=1 // pred_check
      _
    $region35: #{tpu_custom_call.1} parent=1 // pred_check_branch
      %363 = sbr.rel (0) target = $region37
    $region36: #{tpu_custom_call.1} parent=1 // pred_region
      %365 = dma.done [#allocation5], 16
    $region37: #{tpu_custom_call.1} parent=1 // pred_fallthru
      _
    %366 = vsyncpa [#allocation4], 1
    %367 = vsyncpa [#allocation7], 1
    %368 = vsyncpa [#allocation5], 1

</llo_original>
